<compile_context>
chip_gen: v5e
topology: v5e:2x2
jax: 0.10.0
libtpu: 0.0.40
codegen_flags: <defaults>
</compile_context>

<pallas_src>
import functools

import jax
import jax.numpy as jnp
import numpy as np
from jax.experimental import pallas as pl
from jax.experimental.pallas import tpu as pltpu


def _stable_softplus(x):
    """log(1 + exp(x)) == -log(sigmoid(-x)), overflow-safe."""
    return jnp.maximum(x, 0.0) + jnp.log1p(jnp.exp(-jnp.abs(x)))


def _renorm_rows(table, max_norm):
    """nn.Embedding(max_norm=...) forward semantics applied to the whole table."""
    norm = jnp.sqrt(jnp.sum(table * table, axis=-1, keepdims=True))
    scale = jnp.where(norm > max_norm, max_norm / (norm + 1e-7), 1.0)
    return table * scale


def _wordvec_loss_kernel(ctx_tab_ref, word_tab_t_ref, ctx_idx_ref, pn_idx_ref,
                         out_ref, *, batch, block_b, n_ctx, n_pos, n_neg,
                         inv_bc, inv_bk):
    """One batch block per grid step; embeddings gathered in-kernel.

    ctx_tab_ref   : (SIZE, L)       renormalized context-embedding table (VMEM)
    word_tab_t_ref: (L, SIZE)       renormalized word-embedding table, transposed
    ctx_idx_ref   : (block_b, W)    context-word indices
    pn_idx_ref    : (block_b, C+K)  [center | negatives] indices
    out_ref       : (8, 128)        this block's partial loss, broadcast lane-dense
    """
    ctx_tab = ctx_tab_ref[...]
    word_tab_t = word_tab_t_ref[...]
    ctx_idx = ctx_idx_ref[...]
    pn_idx = pn_idx_ref[...]

    size = ctx_tab.shape[0]
    vocab_iota = jax.lax.broadcasted_iota(jnp.int32, (block_b, size), 1)

    # mean over context words == (multi-hot counts / W) @ table:
    # gather fused with the mean; W vreg-wise VPU adds + one small MXU matmul.
    multihot = jnp.zeros((block_b, size), jnp.float32)
    for w in range(n_ctx):                               # static, small (W)
        multihot = multihot + (ctx_idx[:, w:w + 1] == vocab_iota).astype(jnp.float32)
    multihot = multihot * (1.0 / n_ctx)
    cont_mean = jnp.dot(multihot, ctx_tab,
                        preferred_element_type=jnp.float32,
                        precision=jax.lax.Precision.HIGHEST)          # (block_b, L)

    # scores[b, v] = <cont_mean[b], wordvec[v]> for every vocab row v.
    scores = jnp.dot(cont_mean, word_tab_t,
                     preferred_element_type=jnp.float32,
                     precision=jax.lax.Precision.HIGHEST)             # (block_b, SIZE)

    # Mask padded rows of a ragged final batch block.
    row = jax.lax.broadcasted_iota(jnp.int32, (block_b, 1), 0)
    valid = (row + pl.program_id(0) * block_b) < batch                # (block_b, 1)

    # Select the center / negative logits with one-hot lane reduces (C+K is tiny
    # and static) and accumulate the stable -log(sigmoid(.)) losses.
    loss_pos = jnp.zeros((block_b, 1), jnp.float32)
    loss_neg = jnp.zeros((block_b, 1), jnp.float32)
    for j in range(n_pos + n_neg):                       # static, small (C+K)
        onehot_j = (pn_idx[:, j:j + 1] == vocab_iota).astype(jnp.float32)
        logit_j = jnp.sum(onehot_j * scores, axis=-1, keepdims=True)  # (block_b, 1)
        if j < n_pos:
            loss_pos = loss_pos + _stable_softplus(-logit_j)   # -log(sigmoid(x))
        else:
            loss_neg = loss_neg + _stable_softplus(logit_j)    # -log(sigmoid(-x))

    loss_pos = jnp.where(valid, loss_pos, 0.0)
    loss_neg = jnp.where(valid, loss_neg, 0.0)

    # Block contribution: mean over B*C of losspos + mean over B,K of lossneg.
    partial = jnp.sum(loss_pos) * inv_bc + jnp.sum(loss_neg) * inv_bk

    # Single lane/sublane-dense store per grid step (no accumulator RMW).
    out_ref[...] = partial + jnp.zeros(out_ref.shape, jnp.float32)


def wordvec_loss_pallas(context_table, word_table, context, center, negcase,
                        max_norm, block_b=None):
    """Fused skip-gram negative-sampling loss (gather + renorm done in-kernel)."""
    size, length = context_table.shape
    B, n_ctx = context.shape
    n_pos = center.shape[1]
    n_neg = negcase.shape[1]

    # nn.Embedding(max_norm=...) clips looked-up rows; clipping the whole tiny
    # (SIZE, L) table up front is forward-equivalent, and lets the kernel gather
    # straight from the clipped, VMEM-resident table.
    ctx_tab = _renorm_rows(context_table.astype(jnp.float32), max_norm)
    word_tab_t = _renorm_rows(word_table.astype(jnp.float32), max_norm).T   # (L, SIZE)

    ctx_idx = context.astype(jnp.int32)                                      # (B, W)
    pn_idx = jnp.concatenate([center, negcase], axis=1).astype(jnp.int32)    # (B, C+K)

    if block_b is None:
        if B >= 16:
            # Multiple of 8, and >= 2 blocks so both v7x TensorCores get work.
            block_b = min(1024, ((B + 15) // 16) * 8)
        else:
            block_b = B          # block == full dim (always a legal block shape)
    num_blocks = pl.cdiv(B, block_b)

    kernel = functools.partial(
        _wordvec_loss_kernel,
        batch=B, block_b=block_b, n_ctx=n_ctx, n_pos=n_pos, n_neg=n_neg,
        inv_bc=1.0 / float(B * n_pos), inv_bk=1.0 / float(B * n_neg))

    partials = pl.pallas_call(
        kernel,
        grid=(num_blocks,),
        in_specs=[
            # Tables: constant block index -> DMA'd into VMEM once, then reused.
            pl.BlockSpec((size, length), lambda i: (0, 0)),
            pl.BlockSpec((length, size), lambda i: (0, 0)),
            # Only int32 indices stream with the grid (tiny HBM traffic).
            pl.BlockSpec((block_b, n_ctx), lambda i: (i, 0)),
            pl.BlockSpec((block_b, n_pos + n_neg), lambda i: (i, 0)),
        ],
        # One lane-dense (8,128) partial tile per batch block: disjoint writes,
        # safe to mark the grid axis "parallel" (uses both TCs on v7x).
        out_specs=pl.BlockSpec((None, 8, 128), lambda i: (i, 0, 0)),
        out_shape=jax.ShapeDtypeStruct((num_blocks, 8, 128), jnp.float32),
        compiler_params=pltpu.CompilerParams(
            dimension_semantics=("parallel",),
            vmem_limit_bytes=32 * 1024 * 1024,
        ),
    )(ctx_tab, word_tab_t, ctx_idx, pn_idx)

    # Every element of a block's tile holds that block's partial; pick one lane.
    return jnp.sum(partials[:, 0, 0])


class WordVecPallas:
    """JAX/Pallas port of the PyTorch WordVec module (forward pass)."""

    def __init__(self, size, length, window, max_norm, key):
        self.vecsize = size
        self.dirlength = length
        self.window = window
        self.max_norm = float(max_norm)
        k1, k2 = jax.random.split(key)
        # nn.Embedding default init: N(0, 1)
        self.wordvec = jax.random.normal(k1, (size, length), jnp.float32)
        self.contextvec = jax.random.normal(k2, (size, length), jnp.float32)

    def __call__(self, context, center, negcase):
        return wordvec_loss_pallas(self.contextvec, self.wordvec,
                                   context, center, negcase, self.max_norm)


def _embedding_lookup(weight, idx, max_norm):
    """Gather + max_norm rescale (forward semantics of nn.Embedding(max_norm=...))."""
    v = jnp.take(weight, idx, axis=0)                               # (..., L)
    norm = jnp.sqrt(jnp.sum(v * v, axis=-1, keepdims=True))
    scale = jnp.where(norm > max_norm, max_norm / (norm + 1e-7), 1.0)
    return v * scale


def _reference_loss(context_table, word_table, context, center, negcase, max_norm):
    """Pure-JAX reference mirroring the PyTorch forward (stable -log sigmoid)."""
    cont = _embedding_lookup(context_table, context, max_norm)      # (B, W, L)
    cent = _embedding_lookup(word_table, center, max_norm)          # (B, C, L)
    neg = _embedding_lookup(word_table, negcase, max_norm)          # (B, K, L)
    cont_m = jnp.mean(cont, axis=1, keepdims=True)                  # (B, 1, L)
    pos = jnp.sum(cont_m * cent, axis=-1)                           # (B, C)
    ngs = jnp.sum(cont_m * neg, axis=-1)                            # (B, K)
    losspos = _stable_softplus(-pos)       # == -log(sigmoid(pos))
    lossneg = _stable_softplus(ngs)        # == -log(sigmoid(-ngs))
    return jnp.mean(losspos) + jnp.mean(jnp.mean(lossneg, axis=1))


if __name__ == "__main__":
    key = jax.random.PRNGKey(0)
    k_model, k_ctx, k_cen, k_neg, k2_ctx, k2_cen, k2_neg = jax.random.split(key, 7)

    SIZE = 32        # vocabulary size
    LENGTH = 32      # embedding dim (hidden)
    WINDOW = 2       # -> 2*WINDOW = 4 context words per example
    MAX_NORM = 1.0
    B = 8            # batch
    W = 2 * WINDOW   # context words per example
    K = 5            # negative samples per example

    model = WordVecPallas(SIZE, LENGTH, WINDOW, MAX_NORM, k_model)

    context = jax.random.randint(k_ctx, (B, W), 0, SIZE, dtype=jnp.int32)
    center = jax.random.randint(k_cen, (B, 1), 0, SIZE, dtype=jnp.int32)
    negcase = jax.random.randint(k_neg, (B, K), 0, SIZE, dtype=jnp.int32)

    loss = model(context, center, negcase)
    jax.block_until_ready(loss)
    ref = _reference_loss(model.contextvec, model.wordvec, context, center,
                          negcase, MAX_NORM)
    np.testing.assert_allclose(np.asarray(loss), np.asarray(ref),
                               rtol=1e-4, atol=1e-4)

    # Second check: multi-block grid with a ragged final batch block (mask path).
    B2 = 12
    context2 = jax.random.randint(k2_ctx, (B2, W), 0, SIZE, dtype=jnp.int32)
    center2 = jax.random.randint(k2_cen, (B2, 1), 0, SIZE, dtype=jnp.int32)
    negcase2 = jax.random.randint(k2_neg, (B2, K), 0, SIZE, dtype=jnp.int32)
    loss2 = wordvec_loss_pallas(model.contextvec, model.wordvec, context2,
                                center2, negcase2, MAX_NORM, block_b=8)
    jax.block_until_ready(loss2)
    ref2 = _reference_loss(model.contextvec, model.wordvec, context2, center2,
                           negcase2, MAX_NORM)
    np.testing.assert_allclose(np.asarray(loss2), np.asarray(ref2),
                               rtol=1e-4, atol=1e-4)

    print("KERNEL_OK")
</pallas_src>

<mosaic_0001>
module attributes {stable_mosaic.version = 11 : i64} {
  func.func @_wordvec_loss_kernel(%arg0: i32, %arg1: memref<32x32xf32, #tpu.memory_space<vmem>>, %arg2: memref<32x32xf32, #tpu.memory_space<vmem>>, %arg3: memref<8x4xi32, #tpu.memory_space<vmem>>, %arg4: memref<8x6xi32, #tpu.memory_space<vmem>>, %arg5: memref<1x8x128xf32, #tpu.memory_space<vmem>>) attributes {dimension_semantics = [#tpu.dimension_semantics<parallel>], iteration_bounds = array<i64: 1>, scalar_prefetch = 0 : i64, scratch_operands = 0 : i64, tpu.core_type = #tpu.core_type<tc>, window_params = [{pipeline_mode = #tpu.pipeline_mode<synchronous>, transform_indices = @transform_0, window_bounds = array<i64: 32, 32>}, {pipeline_mode = #tpu.pipeline_mode<synchronous>, transform_indices = @transform_1, window_bounds = array<i64: 32, 32>}, {transform_indices = @transform_2, window_bounds = array<i64: 8, 4>}, {transform_indices = @transform_3, window_bounds = array<i64: 8, 6>}, {transform_indices = @transform_4, window_bounds = array<i64: 1, 8, 128>}]} {
    %c0 = arith.constant 0 : index
    %c0_0 = arith.constant 0 : index
    %0 = vector.load %arg1[%c0, %c0_0] : memref<32x32xf32, #tpu.memory_space<vmem>>, vector<32x32xf32>
    %c0_1 = arith.constant 0 : index
    %c0_2 = arith.constant 0 : index
    %1 = vector.load %arg2[%c0_1, %c0_2] : memref<32x32xf32, #tpu.memory_space<vmem>>, vector<32x32xf32>
    %c0_3 = arith.constant 0 : index
    %c0_4 = arith.constant 0 : index
    %2 = vector.load %arg3[%c0_3, %c0_4] : memref<8x4xi32, #tpu.memory_space<vmem>>, vector<8x4xi32>
    %c0_5 = arith.constant 0 : index
    %c0_6 = arith.constant 0 : index
    %3 = vector.load %arg4[%c0_5, %c0_6] : memref<8x6xi32, #tpu.memory_space<vmem>>, vector<8x6xi32>
    %4 = tpu.iota {dimensions = array<i32: 1>} : vector<8x32xi32>
    %cst = arith.constant 0.000000e+00 : f32
    %5 = vector.broadcast %cst : f32 to vector<8x32xf32>
    %6 = vector.extract_strided_slice %2 {offsets = [0, 0], sizes = [8, 1], strides = [1, 1]} : vector<8x4xi32> to vector<8x1xi32>
    %7 = vector.broadcast %6 : vector<8x1xi32> to vector<8x32xi32>
    %8 = arith.cmpi eq, %7, %4 : vector<8x32xi32>
    %9 = arith.extui %8 : vector<8x32xi1> to vector<8x32xi32>
    %10 = arith.sitofp %9 : vector<8x32xi32> to vector<8x32xf32>
    %11 = arith.addf %5, %10 : vector<8x32xf32>
    %12 = vector.extract_strided_slice %2 {offsets = [0, 1], sizes = [8, 1], strides = [1, 1]} : vector<8x4xi32> to vector<8x1xi32>
    %13 = vector.broadcast %12 : vector<8x1xi32> to vector<8x32xi32>
    %14 = arith.cmpi eq, %13, %4 : vector<8x32xi32>
    %15 = arith.extui %14 : vector<8x32xi1> to vector<8x32xi32>
    %16 = arith.sitofp %15 : vector<8x32xi32> to vector<8x32xf32>
    %17 = arith.addf %11, %16 : vector<8x32xf32>
    %18 = vector.extract_strided_slice %2 {offsets = [0, 2], sizes = [8, 1], strides = [1, 1]} : vector<8x4xi32> to vector<8x1xi32>
    %19 = vector.broadcast %18 : vector<8x1xi32> to vector<8x32xi32>
    %20 = arith.cmpi eq, %19, %4 : vector<8x32xi32>
    %21 = arith.extui %20 : vector<8x32xi1> to vector<8x32xi32>
    %22 = arith.sitofp %21 : vector<8x32xi32> to vector<8x32xf32>
    %23 = arith.addf %17, %22 : vector<8x32xf32>
    %24 = vector.extract_strided_slice %2 {offsets = [0, 3], sizes = [8, 1], strides = [1, 1]} : vector<8x4xi32> to vector<8x1xi32>
    %25 = vector.broadcast %24 : vector<8x1xi32> to vector<8x32xi32>
    %26 = arith.cmpi eq, %25, %4 : vector<8x32xi32>
    %27 = arith.extui %26 : vector<8x32xi1> to vector<8x32xi32>
    %28 = arith.sitofp %27 : vector<8x32xi32> to vector<8x32xf32>
    %29 = arith.addf %23, %28 : vector<8x32xf32>
    %cst_7 = arith.constant 2.500000e-01 : f32
    %30 = vector.broadcast %cst_7 : f32 to vector<8x32xf32>
    %31 = arith.mulf %29, %30 : vector<8x32xf32>
    %cst_8 = arith.constant dense<0.000000e+00> : vector<8x32xf32>
    %32 = tpu.matmul %31, %0, %cst_8 {dimension_numbers = #tpu.dot_dimension_numbers<[1], [0], [0], [1], [0, 0, 1, 1], [], []>, precision = #tpu.contract_precision<fp32>} : vector<8x32xf32>, vector<32x32xf32>, vector<8x32xf32> -> vector<8x32xf32>
    %cst_9 = arith.constant dense<0.000000e+00> : vector<8x32xf32>
    %33 = tpu.matmul %32, %1, %cst_9 {dimension_numbers = #tpu.dot_dimension_numbers<[1], [0], [0], [1], [0, 0, 1, 1], [], []>, precision = #tpu.contract_precision<fp32>} : vector<8x32xf32>, vector<32x32xf32>, vector<8x32xf32> -> vector<8x32xf32>
    %34 = tpu.iota {dimensions = array<i32: 0>} : vector<8x1xi32>
    %c8_i32 = arith.constant 8 : i32
    %35 = arith.muli %arg0, %c8_i32 : i32
    %36 = vector.broadcast %35 : i32 to vector<8x1xi32>
    %37 = arith.addi %34, %36 : vector<8x1xi32>
    %c8_i32_10 = arith.constant 8 : i32
    %38 = vector.broadcast %c8_i32_10 : i32 to vector<8x1xi32>
    %39 = arith.cmpi slt, %37, %38 : vector<8x1xi32>
    %cst_11 = arith.constant 0.000000e+00 : f32
    %40 = vector.broadcast %cst_11 : f32 to vector<8x1xf32>
    %cst_12 = arith.constant 0.000000e+00 : f32
    %41 = vector.broadcast %cst_12 : f32 to vector<8x1xf32>
    %42 = vector.extract_strided_slice %3 {offsets = [0, 0], sizes = [8, 1], strides = [1, 1]} : vector<8x6xi32> to vector<8x1xi32>
    %43 = vector.broadcast %42 : vector<8x1xi32> to vector<8x32xi32>
    %44 = arith.cmpi eq, %43, %4 : vector<8x32xi32>
    %45 = arith.extui %44 : vector<8x32xi1> to vector<8x32xi32>
    %46 = arith.sitofp %45 : vector<8x32xi32> to vector<8x32xf32>
    %47 = arith.mulf %46, %33 : vector<8x32xf32>
    %cst_13 = arith.constant dense<0.000000e+00> : vector<8xf32>
    %48 = vector.multi_reduction <add>, %47, %cst_13 [1] : vector<8x32xf32> to vector<8xf32>
    %49 = vector.shape_cast %48 : vector<8xf32> to vector<8x1xf32>
    %cst_14 = arith.constant 0.000000e+00 : f32
    %50 = vector.broadcast %cst_14 : f32 to vector<8x1xf32>
    %51 = arith.subf %50, %49 : vector<8x1xf32>
    %cst_15 = arith.constant 0.000000e+00 : f32
    %52 = vector.broadcast %cst_15 : f32 to vector<8x1xf32>
    %53 = arith.maximumf %51, %52 : vector<8x1xf32>
    %54 = math.absf %51 : vector<8x1xf32>
    %cst_16 = arith.constant 0.000000e+00 : f32
    %55 = vector.broadcast %cst_16 : f32 to vector<8x1xf32>
    %56 = arith.subf %55, %54 : vector<8x1xf32>
    %57 = math.exp %56 : vector<8x1xf32>
    %58 = math.log1p %57 : vector<8x1xf32>
    %59 = arith.addf %53, %58 : vector<8x1xf32>
    %60 = arith.addf %40, %59 : vector<8x1xf32>
    %61 = vector.extract_strided_slice %3 {offsets = [0, 1], sizes = [8, 1], strides = [1, 1]} : vector<8x6xi32> to vector<8x1xi32>
    %62 = vector.broadcast %61 : vector<8x1xi32> to vector<8x32xi32>
    %63 = arith.cmpi eq, %62, %4 : vector<8x32xi32>
    %64 = arith.extui %63 : vector<8x32xi1> to vector<8x32xi32>
    %65 = arith.sitofp %64 : vector<8x32xi32> to vector<8x32xf32>
    %66 = arith.mulf %65, %33 : vector<8x32xf32>
    %cst_17 = arith.constant dense<0.000000e+00> : vector<8xf32>
    %67 = vector.multi_reduction <add>, %66, %cst_17 [1] : vector<8x32xf32> to vector<8xf32>
    %68 = vector.shape_cast %67 : vector<8xf32> to vector<8x1xf32>
    %cst_18 = arith.constant 0.000000e+00 : f32
    %69 = vector.broadcast %cst_18 : f32 to vector<8x1xf32>
    %70 = arith.maximumf %68, %69 : vector<8x1xf32>
    %71 = math.absf %68 : vector<8x1xf32>
    %cst_19 = arith.constant 0.000000e+00 : f32
    %72 = vector.broadcast %cst_19 : f32 to vector<8x1xf32>
    %73 = arith.subf %72, %71 : vector<8x1xf32>
    %74 = math.exp %73 : vector<8x1xf32>
    %75 = math.log1p %74 : vector<8x1xf32>
    %76 = arith.addf %70, %75 : vector<8x1xf32>
    %77 = arith.addf %41, %76 : vector<8x1xf32>
    %78 = vector.extract_strided_slice %3 {offsets = [0, 2], sizes = [8, 1], strides = [1, 1]} : vector<8x6xi32> to vector<8x1xi32>
    %79 = vector.broadcast %78 : vector<8x1xi32> to vector<8x32xi32>
    %80 = arith.cmpi eq, %79, %4 : vector<8x32xi32>
    %81 = arith.extui %80 : vector<8x32xi1> to vector<8x32xi32>
    %82 = arith.sitofp %81 : vector<8x32xi32> to vector<8x32xf32>
    %83 = arith.mulf %82, %33 : vector<8x32xf32>
    %cst_20 = arith.constant dense<0.000000e+00> : vector<8xf32>
    %84 = vector.multi_reduction <add>, %83, %cst_20 [1] : vector<8x32xf32> to vector<8xf32>
    %85 = vector.shape_cast %84 : vector<8xf32> to vector<8x1xf32>
    %cst_21 = arith.constant 0.000000e+00 : f32
    %86 = vector.broadcast %cst_21 : f32 to vector<8x1xf32>
    %87 = arith.maximumf %85, %86 : vector<8x1xf32>
    %88 = math.absf %85 : vector<8x1xf32>
    %cst_22 = arith.constant 0.000000e+00 : f32
    %89 = vector.broadcast %cst_22 : f32 to vector<8x1xf32>
    %90 = arith.subf %89, %88 : vector<8x1xf32>
    %91 = math.exp %90 : vector<8x1xf32>
    %92 = math.log1p %91 : vector<8x1xf32>
    %93 = arith.addf %87, %92 : vector<8x1xf32>
    %94 = arith.addf %77, %93 : vector<8x1xf32>
    %95 = vector.extract_strided_slice %3 {offsets = [0, 3], sizes = [8, 1], strides = [1, 1]} : vector<8x6xi32> to vector<8x1xi32>
    %96 = vector.broadcast %95 : vector<8x1xi32> to vector<8x32xi32>
    %97 = arith.cmpi eq, %96, %4 : vector<8x32xi32>
    %98 = arith.extui %97 : vector<8x32xi1> to vector<8x32xi32>
    %99 = arith.sitofp %98 : vector<8x32xi32> to vector<8x32xf32>
    %100 = arith.mulf %99, %33 : vector<8x32xf32>
    %cst_23 = arith.constant dense<0.000000e+00> : vector<8xf32>
    %101 = vector.multi_reduction <add>, %100, %cst_23 [1] : vector<8x32xf32> to vector<8xf32>
    %102 = vector.shape_cast %101 : vector<8xf32> to vector<8x1xf32>
    %cst_24 = arith.constant 0.000000e+00 : f32
    %103 = vector.broadcast %cst_24 : f32 to vector<8x1xf32>
    %104 = arith.maximumf %102, %103 : vector<8x1xf32>
    %105 = math.absf %102 : vector<8x1xf32>
    %cst_25 = arith.constant 0.000000e+00 : f32
    %106 = vector.broadcast %cst_25 : f32 to vector<8x1xf32>
    %107 = arith.subf %106, %105 : vector<8x1xf32>
    %108 = math.exp %107 : vector<8x1xf32>
    %109 = math.log1p %108 : vector<8x1xf32>
    %110 = arith.addf %104, %109 : vector<8x1xf32>
    %111 = arith.addf %94, %110 : vector<8x1xf32>
    %112 = vector.extract_strided_slice %3 {offsets = [0, 4], sizes = [8, 1], strides = [1, 1]} : vector<8x6xi32> to vector<8x1xi32>
    %113 = vector.broadcast %112 : vector<8x1xi32> to vector<8x32xi32>
    %114 = arith.cmpi eq, %113, %4 : vector<8x32xi32>
    %115 = arith.extui %114 : vector<8x32xi1> to vector<8x32xi32>
    %116 = arith.sitofp %115 : vector<8x32xi32> to vector<8x32xf32>
    %117 = arith.mulf %116, %33 : vector<8x32xf32>
    %cst_26 = arith.constant dense<0.000000e+00> : vector<8xf32>
    %118 = vector.multi_reduction <add>, %117, %cst_26 [1] : vector<8x32xf32> to vector<8xf32>
    %119 = vector.shape_cast %118 : vector<8xf32> to vector<8x1xf32>
    %cst_27 = arith.constant 0.000000e+00 : f32
    %120 = vector.broadcast %cst_27 : f32 to vector<8x1xf32>
    %121 = arith.maximumf %119, %120 : vector<8x1xf32>
    %122 = math.absf %119 : vector<8x1xf32>
    %cst_28 = arith.constant 0.000000e+00 : f32
    %123 = vector.broadcast %cst_28 : f32 to vector<8x1xf32>
    %124 = arith.subf %123, %122 : vector<8x1xf32>
    %125 = math.exp %124 : vector<8x1xf32>
    %126 = math.log1p %125 : vector<8x1xf32>
    %127 = arith.addf %121, %126 : vector<8x1xf32>
    %128 = arith.addf %111, %127 : vector<8x1xf32>
    %129 = vector.extract_strided_slice %3 {offsets = [0, 5], sizes = [8, 1], strides = [1, 1]} : vector<8x6xi32> to vector<8x1xi32>
    %130 = vector.broadcast %129 : vector<8x1xi32> to vector<8x32xi32>
    %131 = arith.cmpi eq, %130, %4 : vector<8x32xi32>
    %132 = arith.extui %131 : vector<8x32xi1> to vector<8x32xi32>
    %133 = arith.sitofp %132 : vector<8x32xi32> to vector<8x32xf32>
    %134 = arith.mulf %133, %33 : vector<8x32xf32>
    %cst_29 = arith.constant dense<0.000000e+00> : vector<8xf32>
    %135 = vector.multi_reduction <add>, %134, %cst_29 [1] : vector<8x32xf32> to vector<8xf32>
    %136 = vector.shape_cast %135 : vector<8xf32> to vector<8x1xf32>
    %cst_30 = arith.constant 0.000000e+00 : f32
    %137 = vector.broadcast %cst_30 : f32 to vector<8x1xf32>
    %138 = arith.maximumf %136, %137 : vector<8x1xf32>
    %139 = math.absf %136 : vector<8x1xf32>
    %cst_31 = arith.constant 0.000000e+00 : f32
    %140 = vector.broadcast %cst_31 : f32 to vector<8x1xf32>
    %141 = arith.subf %140, %139 : vector<8x1xf32>
    %142 = math.exp %141 : vector<8x1xf32>
    %143 = math.log1p %142 : vector<8x1xf32>
    %144 = arith.addf %138, %143 : vector<8x1xf32>
    %145 = arith.addf %128, %144 : vector<8x1xf32>
    %cst_32 = arith.constant 0.000000e+00 : f32
    %146 = vector.broadcast %cst_32 : f32 to vector<8x1xf32>
    %147 = arith.select %39, %60, %146 : vector<8x1xi1>, vector<8x1xf32>
    %cst_33 = arith.constant 0.000000e+00 : f32
    %148 = vector.broadcast %cst_33 : f32 to vector<8x1xf32>
    %149 = arith.select %39, %145, %148 : vector<8x1xi1>, vector<8x1xf32>
    %150 = vector.shape_cast %147 : vector<8x1xf32> to vector<1x8x1xf32>
    %cst_34 = arith.constant dense<0.000000e+00> : vector<1xf32>
    %151 = vector.multi_reduction <add>, %150, %cst_34 [1, 2] : vector<1x8x1xf32> to vector<1xf32>
    %152 = vector.shape_cast %151 : vector<1xf32> to vector<1x1x1xf32>
    %153 = vector.extract %152[0, 0, 0] : f32 from vector<1x1x1xf32>
    %cst_35 = arith.constant 1.250000e-01 : f32
    %154 = arith.mulf %153, %cst_35 : f32
    %155 = vector.shape_cast %149 : vector<8x1xf32> to vector<1x8x1xf32>
    %cst_36 = arith.constant dense<0.000000e+00> : vector<1xf32>
    %156 = vector.multi_reduction <add>, %155, %cst_36 [1, 2] : vector<1x8x1xf32> to vector<1xf32>
    %157 = vector.shape_cast %156 : vector<1xf32> to vector<1x1x1xf32>
    %158 = vector.extract %157[0, 0, 0] : f32 from vector<1x1x1xf32>
    %cst_37 = arith.constant 2.500000e-02 : f32
    %159 = arith.mulf %158, %cst_37 : f32
    %160 = arith.addf %154, %159 : f32
    %cst_38 = arith.constant 0.000000e+00 : f32
    %161 = vector.broadcast %cst_38 : f32 to vector<8x128xf32>
    %162 = vector.broadcast %160 : f32 to vector<8x128xf32>
    %163 = arith.addf %162, %161 : vector<8x128xf32>
    %c0_39 = arith.constant 0 : index
    %c0_40 = arith.constant 0 : index
    %c0_41 = arith.constant 0 : index
    %164 = vector.load %arg5[%c0_39, %c0_40, %c0_41] : memref<1x8x128xf32, #tpu.memory_space<vmem>>, vector<1x8x128xf32>
    %165 = vector.shape_cast %164 : vector<1x8x128xf32> to vector<8x128xf32>
    %166 = vector.shape_cast %163 : vector<8x128xf32> to vector<1x8x128xf32>
    tpu.vector_store %arg5[%c0_39, %c0_40, %c0_41], %166 {strides = array<i32>} : memref<1x8x128xf32, #tpu.memory_space<vmem>>, vector<1x8x128xf32>,
    return
  }
  func.func @transform_0(%arg0: i32) -> (i32, i32) {
    %c0_i32 = arith.constant 0 : i32
    %c0_i32_0 = arith.constant 0 : i32
    %c0_i32_1 = arith.constant 0 : i32
    return %c0_i32, %c0_i32_0 : i32, i32
  }
  func.func @transform_1(%arg0: i32) -> (i32, i32) {
    %c0_i32 = arith.constant 0 : i32
    %c0_i32_0 = arith.constant 0 : i32
    %c0_i32_1 = arith.constant 0 : i32
    return %c0_i32, %c0_i32_0 : i32, i32
  }
  func.func @transform_2(%arg0: i32) -> (i32, i32) {
    %c0_i32 = arith.constant 0 : i32
    %c0_i32_0 = arith.constant 0 : i32
    return %arg0, %c0_i32 : i32, i32
  }
  func.func @transform_3(%arg0: i32) -> (i32, i32) {
    %c0_i32 = arith.constant 0 : i32
    %c0_i32_0 = arith.constant 0 : i32
    return %arg0, %c0_i32 : i32, i32
  }
  func.func @transform_4(%arg0: i32) -> (i32, i32, i32) {
    %c0_i32 = arith.constant 0 : i32
    %c0_i32_0 = arith.constant 0 : i32
    %c0_i32_1 = arith.constant 0 : i32
    return %arg0, %c0_i32, %c0_i32_0 : i32, i32, i32
  }
}

</mosaic_0001>

<llo_original>
// kernel: tpu_custom_call.1
$region0: #{tpu_custom_call.1}
  #allocation0 [shape = 'u32[]', space=smem, size = 0x4, offset = 0x4, fixed_abs, tag = 'smem constant byte address 0x4 - core index']
  #allocation1 [shape = 'u32[72,128]{1,0:T(1,128)}', space=vmem, size = 0x9000, scoped, tag = 'internal scratch']
  %s0 = inlined_call_operand.hbm [shape: f32[32,32], index: 0, kind: input, shape index: {}]
  %s1 = inlined_call_operand.hbm [shape: f32[32,32], index: 1, kind: input, shape index: {}]
  %s2 = inlined_call_operand.vmem [shape: s32[8,4], index: 2, kind: input, shape index: {}]
  %s3 = inlined_call_operand.vmem [shape: s32[8,6], index: 3, kind: input, shape index: {}]
  %s4 = inlined_call_operand.hbm [shape: f32[1,8,128], index: 4, kind: output, shape index: {}]
  %s5 = sld [smem:[#allocation0]]
  $region34: #{tpu_custom_call.1} parent=0
    _
  %s7 = ssub.s32 1, %s5
  %s8 = scalar_select 0, %s7, %s5
  $region1: #{tpu_custom_call.1} parent=0
    #allocation2 [shape = 'u8[16384]{0}', space=vmem, size = 0x4000, scoped, tag = 'input window, operand 0, single buffered']
    #allocation3 [shape = 's32[1]{0}', space=sflag, size = 0x4, scoped, tag = 'scoped memory for tpu_custom_call.1']
    #allocation4 [shape = 's32[1]{0}', space=sflag, size = 0x4, scoped, tag = 'scoped memory for tpu_custom_call.1']
    #allocation5 [shape = 'u8[16384]{0}', space=vmem, size = 0x4000, scoped, tag = 'input window, operand 1, single buffered']
    #allocation6 [shape = 's32[1]{0}', space=sflag, size = 0x4, scoped, tag = 'scoped memory for tpu_custom_call.1']
    #allocation7 [shape = 'u8[4096]{0}', space=vmem, size = 0x1000, scoped, tag = 'output window, operand 0, single buffered']
    %9 = vsyncpa [#allocation3], 0
    %10 = vsyncpa [#allocation6], 0
    %11 = vsyncpa [#allocation4], 0
    // Predicated region
    $region2: #{tpu_custom_call.1} parent=1 // pred_check
      _
    $region3: #{tpu_custom_call.1} parent=1 // pred_check_branch
      %13 = sbr.rel (0) target = $region5
    $region4: #{tpu_custom_call.1} parent=1 // pred_region
      %15 = vsyncadd [#allocation3], 0
      %s16 = sshll.u32 %s0, 4
      %s17 = int_to_ptr.hbm [resolvable:$true] %s16
      %s18 = sshll.u32 [#allocation2], 4
      %s19 = int_to_ptr.vmem [resolvable:$true] %s18
      %24 = dma.hbm_to_vmem [thread:$0]  %s17, 512, %s19, [#allocation3], 128, 128, 8
    $region5: #{tpu_custom_call.1} parent=1 // pred_fallthru
      _
    // Predicated region
    $region6: #{tpu_custom_call.1} parent=1 // pred_check
      _
    $region7: #{tpu_custom_call.1} parent=1 // pred_check_branch
      %26 = sbr.rel (0) target = $region9
    $region8: #{tpu_custom_call.1} parent=1 // pred_region
      %28 = vsyncadd [#allocation6], 0
      %s29 = sshll.u32 %s1, 4
      %s30 = int_to_ptr.hbm [resolvable:$true] %s29
      %s31 = sshll.u32 [#allocation5], 4
      %s32 = int_to_ptr.vmem [resolvable:$true] %s31
      %37 = dma.hbm_to_vmem [thread:$0]  %s30, 512, %s32, [#allocation6], 128, 128, 8
    $region9: #{tpu_custom_call.1} parent=1 // pred_fallthru
      _
    // Predicated region
    $region10: #{tpu_custom_call.1} parent=1 // pred_check
      _
    $region11: #{tpu_custom_call.1} parent=1 // pred_check_branch
      %39 = sbr.rel (0) target = $region13
    $region12: #{tpu_custom_call.1} parent=1 // pred_region
      _
    $region13: #{tpu_custom_call.1} parent=1 // pred_fallthru
      _
    // Predicated region
    $region14: #{tpu_custom_call.1} parent=1 // pred_check
      _
    $region15: #{tpu_custom_call.1} parent=1 // pred_check_branch
      %41 = sbr.rel (0) target = $region17
    $region16: #{tpu_custom_call.1} parent=1 // pred_region
      _
    $region17: #{tpu_custom_call.1} parent=1 // pred_fallthru
      _
    // Predicated region
    $region18: #{tpu_custom_call.1} parent=1 // pred_check
      _
    $region19: #{tpu_custom_call.1} parent=1 // pred_check_branch
      %43 = sbr.rel (0) target = $region21
    $region20: #{tpu_custom_call.1} parent=1 // pred_region
      %45 = dma.done [#allocation3], 512
    $region21: #{tpu_custom_call.1} parent=1 // pred_fallthru
      _
    // Predicated region
    $region22: #{tpu_custom_call.1} parent=1 // pred_check
      _
    $region23: #{tpu_custom_call.1} parent=1 // pred_check_branch
      %47 = sbr.rel (0) target = $region25
    $region24: #{tpu_custom_call.1} parent=1 // pred_region
      %49 = dma.done [#allocation6], 512
    $region25: #{tpu_custom_call.1} parent=1 // pred_fallthru
      _
    %v50 = vld [vmem:[#allocation2] sm:$0xff]
    %v51 = vld [vmem:[#allocation2 + $0x8] sm:$0xff]
    %v52 = vld [vmem:[#allocation2 + $0x10] sm:$0xff]
    %v53 = vld [vmem:[#allocation2 + $0x18] sm:$0xff]
    %v54 = vld [vmem:[#allocation5] sm:$0xff]
    %v55 = vld [vmem:[#allocation5 + $0x8] sm:$0xff]
    %v56 = vld [vmem:[#allocation5 + $0x10] sm:$0xff]
    %v57 = vld [vmem:[#allocation5 + $0x18] sm:$0xff]
    %v58 = vld [vmem:[%s2] sm:$0xff]
    %v59 = vld [vmem:[%s3] sm:$0xff]
    %v60 = vlaneseq
    %v61 = vand.u32 %v60, 127
    %62 = vset.pattern.permute.xlu0 0
    %63 = vperm.xlu0 %62, %v58
    %v64 = vpop.permute.xlu0 %63
    %vm65 = vcmp.eq.s32.totalorder %v64, %v61
    %v66 = vsel %vm65, 1, 0
    %v67 = vcvt.s32.f32 %v66
    %v68 = vadd.f32 %v67, 0.0
    %69 = vset.pattern.permute.xlu0 1
    %70 = vperm.xlu0 %69, %v58
    %v71 = vpop.permute.xlu0 %70
    %vm72 = vcmp.eq.s32.totalorder %v71, %v61
    %v73 = vsel %vm72, 1, 0
    %v74 = vcvt.s32.f32 %v73
    %v75 = vadd.f32 %v68, %v74
    %76 = vset.pattern.permute.xlu0 2
    %77 = vperm.xlu0 %76, %v58
    %v78 = vpop.permute.xlu0 %77
    %vm79 = vcmp.eq.s32.totalorder %v78, %v61
    %v80 = vsel %vm79, 1, 0
    %v81 = vcvt.s32.f32 %v80
    %v82 = vadd.f32 %v75, %v81
    %83 = vset.pattern.permute.xlu0 3
    %84 = vperm.xlu0 %83, %v58
    %v85 = vpop.permute.xlu0 %84
    %vm86 = vcmp.eq.s32.totalorder %v85, %v61
    %v87 = vsel %vm86, 1, 0
    %v88 = vcvt.s32.f32 %v87
    %v89 = vadd.f32 %v82, %v88
    %v90 = vmul.f32 %v89, 0.25
    %vm91 = vcmask 261120
    %v93 = vsel %vm91, %v90, 0
    %95 = vmatpush.msra.mxu0 0.0
    %96 = vmatpush.msra.mxu0 0.0
    %97 = vmatpush.msra.mxu0 0.0
    %98 = vmatpush.msra.mxu0 0.0
    %99 = vmatpush.msra.mxu0 0.0
    %100 = vmatpush.msra.mxu0 0.0
    %101 = vmatpush.msra.mxu0 0.0
    %102 = vmatpush.msra.mxu0 0.0
    %103 = vmatpush.msra.mxu0 0.0
    %104 = vmatpush.msra.mxu0 0.0
    %105 = vmatpush.msra.mxu0 0.0
    %106 = vmatpush.msra.mxu0 0.0
    %v107 = vand.u32 %v53, 4294901760
    %108 = vmatpush.msra.mxu0 %v107
    %v109 = vand.u32 %v52, 4294901760
    %110 = vmatpush.msra.mxu0 %v109
    %v111 = vand.u32 %v51, 4294901760
    %112 = vmatpush.msra.mxu0 %v111
    %v113 = vand.u32 %v50, 4294901760
    %114 = vmatpush.msra.mxu0 %v113
    %v115 = vand.u32 %v93, 4294901760
    %v116 = vsub.f32 %v93, %v115
    %v117 = vand.u32 %v116, 4294901760
    %v118 = vsub.f32 %v116, %v117
    %v119 = vand.u32 %v118, 4294901760
    %120 = vmatmul.f32.gmra.mxu0 %v119
    %v121 = vpop.f32.mrf.mxu0
    %v122 = vadd.f32 0.0, %v121
    %123 = vdwg.mxu0
    %124 = vmatpush.msra.mxu0 0.0
    %125 = vmatpush.msra.mxu0 0.0
    %126 = vmatpush.msra.mxu0 0.0
    %127 = vmatpush.msra.mxu0 0.0
    %128 = vmatpush.msra.mxu0 0.0
    %129 = vmatpush.msra.mxu0 0.0
    %130 = vmatpush.msra.mxu0 0.0
    %131 = vmatpush.msra.mxu0 0.0
    %132 = vmatpush.msra.mxu0 0.0
    %133 = vmatpush.msra.mxu0 0.0
    %134 = vmatpush.msra.mxu0 0.0
    %135 = vmatpush.msra.mxu0 0.0
    %v136 = vand.u32 %v53, 4294901760
    %v137 = vsub.f32 %v53, %v136
    %v138 = vand.u32 %v137, 4294901760
    %v139 = vsub.f32 %v137, %v138
    %v140 = vand.u32 %v139, 4294901760
    %141 = vmatpush.msra.mxu0 %v140
    %v142 = vand.u32 %v52, 4294901760
    %v143 = vsub.f32 %v52, %v142
    %v144 = vand.u32 %v143, 4294901760
    %v145 = vsub.f32 %v143, %v144
    %v146 = vand.u32 %v145, 4294901760
    %147 = vmatpush.msra.mxu0 %v146
    %v148 = vand.u32 %v51, 4294901760
    %v149 = vsub.f32 %v51, %v148
    %v150 = vand.u32 %v149, 4294901760
    %v151 = vsub.f32 %v149, %v150
    %v152 = vand.u32 %v151, 4294901760
    %153 = vmatpush.msra.mxu0 %v152
    %v154 = vand.u32 %v50, 4294901760
    %v155 = vsub.f32 %v50, %v154
    %v156 = vand.u32 %v155, 4294901760
    %v157 = vsub.f32 %v155, %v156
    %v158 = vand.u32 %v157, 4294901760
    %159 = vmatpush.msra.mxu0 %v158
    %v160 = vand.u32 %v93, 4294901760
    %161 = vmatmul.f32.gmra.mxu0 %v160
    %v162 = vpop.f32.mrf.mxu0
    %v163 = vadd.f32 %v122, %v162
    %164 = vdwg.mxu0
    %165 = vmatpush.msra.mxu0 0.0
    %166 = vmatpush.msra.mxu0 0.0
    %167 = vmatpush.msra.mxu0 0.0
    %168 = vmatpush.msra.mxu0 0.0
    %169 = vmatpush.msra.mxu0 0.0
    %170 = vmatpush.msra.mxu0 0.0
    %171 = vmatpush.msra.mxu0 0.0
    %172 = vmatpush.msra.mxu0 0.0
    %173 = vmatpush.msra.mxu0 0.0
    %174 = vmatpush.msra.mxu0 0.0
    %175 = vmatpush.msra.mxu0 0.0
    %176 = vmatpush.msra.mxu0 0.0
    %v177 = vand.u32 %v53, 4294901760
    %v178 = vsub.f32 %v53, %v177
    %179 = vmatpush.msra.mxu0 %v178
    %v180 = vand.u32 %v52, 4294901760
    %v181 = vsub.f32 %v52, %v180
    %182 = vmatpush.msra.mxu0 %v181
    %v183 = vand.u32 %v51, 4294901760
    %v184 = vsub.f32 %v51, %v183
    %185 = vmatpush.msra.mxu0 %v184
    %v186 = vand.u32 %v50, 4294901760
    %v187 = vsub.f32 %v50, %v186
    %188 = vmatpush.msra.mxu0 %v187
    %v189 = vand.u32 %v93, 4294901760
    %v190 = vsub.f32 %v93, %v189
    %191 = vmatmul.f32.gmra.mxu0 %v190
    %v192 = vpop.f32.mrf.mxu0
    %v193 = vadd.f32 %v163, %v192
    %194 = vdwg.mxu0
    %195 = vmatpush.msra.mxu0 0.0
    %196 = vmatpush.msra.mxu0 0.0
    %197 = vmatpush.msra.mxu0 0.0
    %198 = vmatpush.msra.mxu0 0.0
    %199 = vmatpush.msra.mxu0 0.0
    %200 = vmatpush.msra.mxu0 0.0
    %201 = vmatpush.msra.mxu0 0.0
    %202 = vmatpush.msra.mxu0 0.0
    %203 = vmatpush.msra.mxu0 0.0
    %204 = vmatpush.msra.mxu0 0.0
    %205 = vmatpush.msra.mxu0 0.0
    %206 = vmatpush.msra.mxu0 0.0
    %v207 = vand.u32 %v53, 4294901760
    %208 = vmatpush.msra.mxu0 %v207
    %v209 = vand.u32 %v52, 4294901760
    %210 = vmatpush.msra.mxu0 %v209
    %v211 = vand.u32 %v51, 4294901760
    %212 = vmatpush.msra.mxu0 %v211
    %v213 = vand.u32 %v50, 4294901760
    %214 = vmatpush.msra.mxu0 %v213
    %v215 = vand.u32 %v93, 4294901760
    %v216 = vsub.f32 %v93, %v215
    %v217 = vand.u32 %v216, 4294901760
    %218 = vmatmul.f32.gmra.mxu0 %v217
    %v219 = vpop.f32.mrf.mxu0
    %v220 = vadd.f32 %v193, %v219
    %221 = vdwg.mxu0
    %222 = vmatpush.msra.mxu0 0.0
    %223 = vmatpush.msra.mxu0 0.0
    %224 = vmatpush.msra.mxu0 0.0
    %225 = vmatpush.msra.mxu0 0.0
    %226 = vmatpush.msra.mxu0 0.0
    %227 = vmatpush.msra.mxu0 0.0
    %228 = vmatpush.msra.mxu0 0.0
    %229 = vmatpush.msra.mxu0 0.0
    %230 = vmatpush.msra.mxu0 0.0
    %231 = vmatpush.msra.mxu0 0.0
    %232 = vmatpush.msra.mxu0 0.0
    %233 = vmatpush.msra.mxu0 0.0
    %v234 = vand.u32 %v53, 4294901760
    %v235 = vsub.f32 %v53, %v234
    %v236 = vand.u32 %v235, 4294901760
    %237 = vmatpush.msra.mxu0 %v236
    %v238 = vand.u32 %v52, 4294901760
    %v239 = vsub.f32 %v52, %v238
    %v240 = vand.u32 %v239, 4294901760
    %241 = vmatpush.msra.mxu0 %v240
    %v242 = vand.u32 %v51, 4294901760
    %v243 = vsub.f32 %v51, %v242
    %v244 = vand.u32 %v243, 4294901760
    %245 = vmatpush.msra.mxu0 %v244
    %v246 = vand.u32 %v50, 4294901760
    %v247 = vsub.f32 %v50, %v246
    %v248 = vand.u32 %v247, 4294901760
    %249 = vmatpush.msra.mxu0 %v248
    %v250 = vand.u32 %v93, 4294901760
    %251 = vmatmul.f32.gmra.mxu0 %v250
    %v252 = vpop.f32.mrf.mxu0
    %v253 = vadd.f32 %v220, %v252
    %254 = vdwg.mxu0
    %255 = vmatpush.msra.mxu0 0.0
    %256 = vmatpush.msra.mxu0 0.0
    %257 = vmatpush.msra.mxu0 0.0
    %258 = vmatpush.msra.mxu0 0.0
    %259 = vmatpush.msra.mxu0 0.0
    %260 = vmatpush.msra.mxu0 0.0
    %261 = vmatpush.msra.mxu0 0.0
    %262 = vmatpush.msra.mxu0 0.0
    %263 = vmatpush.msra.mxu0 0.0
    %264 = vmatpush.msra.mxu0 0.0
    %265 = vmatpush.msra.mxu0 0.0
    %266 = vmatpush.msra.mxu0 0.0
    %v267 = vand.u32 %v53, 4294901760
    %268 = vmatpush.msra.mxu0 %v267
    %v269 = vand.u32 %v52, 4294901760
    %270 = vmatpush.msra.mxu0 %v269
    %v271 = vand.u32 %v51, 4294901760
    %272 = vmatpush.msra.mxu0 %v271
    %v273 = vand.u32 %v50, 4294901760
    %274 = vmatpush.msra.mxu0 %v273
    %v275 = vand.u32 %v93, 4294901760
    %276 = vmatmul.f32.gmra.mxu0 %v275
    %v277 = vpop.f32.mrf.mxu0
    %v278 = vadd.f32 %v253, %v277
    %279 = vdwg.mxu0
    %v281 = vsel %vm91, %v278, 0
    %283 = vmatpush.msra.mxu0 0.0
    %284 = vmatpush.msra.mxu0 0.0
    %285 = vmatpush.msra.mxu0 0.0
    %286 = vmatpush.msra.mxu0 0.0
    %287 = vmatpush.msra.mxu0 0.0
    %288 = vmatpush.msra.mxu0 0.0
    %289 = vmatpush.msra.mxu0 0.0
    %290 = vmatpush.msra.mxu0 0.0
    %291 = vmatpush.msra.mxu0 0.0
    %292 = vmatpush.msra.mxu0 0.0
    %293 = vmatpush.msra.mxu0 0.0
    %294 = vmatpush.msra.mxu0 0.0
    %v295 = vand.u32 %v57, 4294901760
    %296 = vmatpush.msra.mxu0 %v295
    %v297 = vand.u32 %v56, 4294901760
    %298 = vmatpush.msra.mxu0 %v297
    %v299 = vand.u32 %v55, 4294901760
    %300 = vmatpush.msra.mxu0 %v299
    %v301 = vand.u32 %v54, 4294901760
    %302 = vmatpush.msra.mxu0 %v301
    %v303 = vand.u32 %v281, 4294901760
    %v304 = vsub.f32 %v281, %v303
    %v305 = vand.u32 %v304, 4294901760
    %v306 = vsub.f32 %v304, %v305
    %v307 = vand.u32 %v306, 4294901760
    %308 = vmatmul.f32.gmra.mxu0 %v307
    %v309 = vpop.f32.mrf.mxu0
    %v310 = vadd.f32 0.0, %v309
    %311 = vdwg.mxu0
    %312 = vmatpush.msra.mxu0 0.0
    %313 = vmatpush.msra.mxu0 0.0
    %314 = vmatpush.msra.mxu0 0.0
    %315 = vmatpush.msra.mxu0 0.0
    %316 = vmatpush.msra.mxu0 0.0
    %317 = vmatpush.msra.mxu0 0.0
    %318 = vmatpush.msra.mxu0 0.0
    %319 = vmatpush.msra.mxu0 0.0
    %320 = vmatpush.msra.mxu0 0.0
    %321 = vmatpush.msra.mxu0 0.0
    %322 = vmatpush.msra.mxu0 0.0
    %323 = vmatpush.msra.mxu0 0.0
    %v324 = vand.u32 %v57, 4294901760
    %v325 = vsub.f32 %v57, %v324
    %v326 = vand.u32 %v325, 4294901760
    %v327 = vsub.f32 %v325, %v326
    %v328 = vand.u32 %v327, 4294901760
    %329 = vmatpush.msra.mxu0 %v328
    %v330 = vand.u32 %v56, 4294901760
    %v331 = vsub.f32 %v56, %v330
    %v332 = vand.u32 %v331, 4294901760
    %v333 = vsub.f32 %v331, %v332
    %v334 = vand.u32 %v333, 4294901760
    %335 = vmatpush.msra.mxu0 %v334
    %v336 = vand.u32 %v55, 4294901760
    %v337 = vsub.f32 %v55, %v336
    %v338 = vand.u32 %v337, 4294901760
    %v339 = vsub.f32 %v337, %v338
    %v340 = vand.u32 %v339, 4294901760
    %341 = vmatpush.msra.mxu0 %v340
    %v342 = vand.u32 %v54, 4294901760
    %v343 = vsub.f32 %v54, %v342
    %v344 = vand.u32 %v343, 4294901760
    %v345 = vsub.f32 %v343, %v344
    %v346 = vand.u32 %v345, 4294901760
    %347 = vmatpush.msra.mxu0 %v346
    %v348 = vand.u32 %v281, 4294901760
    %349 = vmatmul.f32.gmra.mxu0 %v348
    %v350 = vpop.f32.mrf.mxu0
    %v351 = vadd.f32 %v310, %v350
    %352 = vdwg.mxu0
    %353 = vmatpush.msra.mxu0 0.0
    %354 = vmatpush.msra.mxu0 0.0
    %355 = vmatpush.msra.mxu0 0.0
    %356 = vmatpush.msra.mxu0 0.0
    %357 = vmatpush.msra.mxu0 0.0
    %358 = vmatpush.msra.mxu0 0.0
    %359 = vmatpush.msra.mxu0 0.0
    %360 = vmatpush.msra.mxu0 0.0
    %361 = vmatpush.msra.mxu0 0.0
    %362 = vmatpush.msra.mxu0 0.0
    %363 = vmatpush.msra.mxu0 0.0
    %364 = vmatpush.msra.mxu0 0.0
    %v365 = vand.u32 %v57, 4294901760
    %v366 = vsub.f32 %v57, %v365
    %367 = vmatpush.msra.mxu0 %v366
    %v368 = vand.u32 %v56, 4294901760
    %v369 = vsub.f32 %v56, %v368
    %370 = vmatpush.msra.mxu0 %v369
    %v371 = vand.u32 %v55, 4294901760
    %v372 = vsub.f32 %v55, %v371
    %373 = vmatpush.msra.mxu0 %v372
    %v374 = vand.u32 %v54, 4294901760
    %v375 = vsub.f32 %v54, %v374
    %376 = vmatpush.msra.mxu0 %v375
    %v377 = vand.u32 %v281, 4294901760
    %v378 = vsub.f32 %v281, %v377
    %379 = vmatmul.f32.gmra.mxu0 %v378
    %v380 = vpop.f32.mrf.mxu0
    %v381 = vadd.f32 %v351, %v380
    %382 = vdwg.mxu0
    %383 = vmatpush.msra.mxu0 0.0
    %384 = vmatpush.msra.mxu0 0.0
    %385 = vmatpush.msra.mxu0 0.0
    %386 = vmatpush.msra.mxu0 0.0
    %387 = vmatpush.msra.mxu0 0.0
    %388 = vmatpush.msra.mxu0 0.0
    %389 = vmatpush.msra.mxu0 0.0
    %390 = vmatpush.msra.mxu0 0.0
    %391 = vmatpush.msra.mxu0 0.0
    %392 = vmatpush.msra.mxu0 0.0
    %393 = vmatpush.msra.mxu0 0.0
    %394 = vmatpush.msra.mxu0 0.0
    %v395 = vand.u32 %v57, 4294901760
    %396 = vmatpush.msra.mxu0 %v395
    %v397 = vand.u32 %v56, 4294901760
    %398 = vmatpush.msra.mxu0 %v397
    %v399 = vand.u32 %v55, 4294901760
    %400 = vmatpush.msra.mxu0 %v399
    %v401 = vand.u32 %v54, 4294901760
    %402 = vmatpush.msra.mxu0 %v401
    %v403 = vand.u32 %v281, 4294901760
    %v404 = vsub.f32 %v281, %v403
    %v405 = vand.u32 %v404, 4294901760
    %406 = vmatmul.f32.gmra.mxu0 %v405
    %v407 = vpop.f32.mrf.mxu0
    %v408 = vadd.f32 %v381, %v407
    %409 = vdwg.mxu0
    %410 = vmatpush.msra.mxu0 0.0
    %411 = vmatpush.msra.mxu0 0.0
    %412 = vmatpush.msra.mxu0 0.0
    %413 = vmatpush.msra.mxu0 0.0
    %414 = vmatpush.msra.mxu0 0.0
    %415 = vmatpush.msra.mxu0 0.0
    %416 = vmatpush.msra.mxu0 0.0
    %417 = vmatpush.msra.mxu0 0.0
    %418 = vmatpush.msra.mxu0 0.0
    %419 = vmatpush.msra.mxu0 0.0
    %420 = vmatpush.msra.mxu0 0.0
    %421 = vmatpush.msra.mxu0 0.0
    %v422 = vand.u32 %v57, 4294901760
    %v423 = vsub.f32 %v57, %v422
    %v424 = vand.u32 %v423, 4294901760
    %425 = vmatpush.msra.mxu0 %v424
    %v426 = vand.u32 %v56, 4294901760
    %v427 = vsub.f32 %v56, %v426
    %v428 = vand.u32 %v427, 4294901760
    %429 = vmatpush.msra.mxu0 %v428
    %v430 = vand.u32 %v55, 4294901760
    %v431 = vsub.f32 %v55, %v430
    %v432 = vand.u32 %v431, 4294901760
    %433 = vmatpush.msra.mxu0 %v432
    %v434 = vand.u32 %v54, 4294901760
    %v435 = vsub.f32 %v54, %v434
    %v436 = vand.u32 %v435, 4294901760
    %437 = vmatpush.msra.mxu0 %v436
    %v438 = vand.u32 %v281, 4294901760
    %439 = vmatmul.f32.gmra.mxu0 %v438
    %v440 = vpop.f32.mrf.mxu0
    %v441 = vadd.f32 %v408, %v440
    %442 = vdwg.mxu0
    %443 = vmatpush.msra.mxu0 0.0
    %444 = vmatpush.msra.mxu0 0.0
    %445 = vmatpush.msra.mxu0 0.0
    %446 = vmatpush.msra.mxu0 0.0
    %447 = vmatpush.msra.mxu0 0.0
    %448 = vmatpush.msra.mxu0 0.0
    %449 = vmatpush.msra.mxu0 0.0
    %450 = vmatpush.msra.mxu0 0.0
    %451 = vmatpush.msra.mxu0 0.0
    %452 = vmatpush.msra.mxu0 0.0
    %453 = vmatpush.msra.mxu0 0.0
    %454 = vmatpush.msra.mxu0 0.0
    %v455 = vand.u32 %v57, 4294901760
    %456 = vmatpush.msra.mxu0 %v455
    %v457 = vand.u32 %v56, 4294901760
    %458 = vmatpush.msra.mxu0 %v457
    %v459 = vand.u32 %v55, 4294901760
    %460 = vmatpush.msra.mxu0 %v459
    %v461 = vand.u32 %v54, 4294901760
    %462 = vmatpush.msra.mxu0 %v461
    %v463 = vand.u32 %v281, 4294901760
    %464 = vmatmul.f32.gmra.mxu0 %v463
    %v465 = vpop.f32.mrf.mxu0
    %v466 = vadd.f32 %v441, %v465
    %467 = vdwg.mxu0
    %v468 = vlaneseq
    %v469 = vshrl.u32 %v468, 7
    %s470 = smul.u32 0, 8
    %v471 = vstv %s470
    %v472 = vadd.s32 %v469, %v471
    %vm473 = vcmp.lt.s32.totalorder %v472, 8
    %474 = vset.pattern.permute.xlu0 0
    %475 = vperm.xlu0 %474, %v59
    %v476 = vpop.permute.xlu0 %475
    %vm477 = vcmp.eq.s32.totalorder %v476, %v61
    %v478 = vsel %vm477, 1, 0
    %v479 = vcvt.s32.f32 %v478
    %v480 = vmul.f32 %v479, %v466
    %v481 = vsel %vm91, %v480, 0.0
    %482 = vadd.xlane.f32.xlu0 %v481
    %v483 = vpop.xlane.xlu0 %482
    %v484 = vsub.f32 0.0, %v483
    %v485 = vmax.f32 %v484, 0.0
    %v486 = vand.u32 2147483647, %v484
    %v487 = vsub.f32 0.0, %v486
    %v488 = vmul.f32 %v487, 1.442695
    %v489 = vpow.pop %v488
    %v490 = vadd.f32 %v489, 1.0
    %v491 = vlog2.pop %v490
    %v492 = vmul.f32 %v491, 0.6931472
    %v493 = vmul.f32 -0.5, %v489
    %v494 = vadd.f32 %v493, 1.0
    %v495 = vmul.f32 %v494, %v489
    %v496 = vand.u32 2147483647, %v489
    %vm497 = vcmp.lt.f32.partialorder %v496, 0.0004427343
    %v498 = vsel %vm497, %v495, %v492
    %v499 = vadd.f32 %v485, %v498
    %v500 = vadd.f32 %v499, 0.0
    %501 = vset.pattern.permute.xlu0 1
    %502 = vperm.xlu0 %501, %v59
    %v503 = vpop.permute.xlu0 %502
    %vm504 = vcmp.eq.s32.totalorder %v503, %v61
    %v505 = vsel %vm504, 1, 0
    %v506 = vcvt.s32.f32 %v505
    %v507 = vmul.f32 %v506, %v466
    %v508 = vsel %vm91, %v507, 0.0
    %509 = vadd.xlane.f32.xlu0 %v508
    %v510 = vpop.xlane.xlu0 %509
    %v511 = vmax.f32 %v510, 0.0
    %v512 = vand.u32 2147483647, %v510
    %v513 = vsub.f32 0.0, %v512
    %v514 = vmul.f32 %v513, 1.442695
    %v515 = vpow.pop %v514
    %v516 = vadd.f32 %v515, 1.0
    %v517 = vlog2.pop %v516
    %v518 = vmul.f32 %v517, 0.6931472
    %v519 = vmul.f32 -0.5, %v515
    %v520 = vadd.f32 %v519, 1.0
    %v521 = vmul.f32 %v520, %v515
    %v522 = vand.u32 2147483647, %v515
    %vm523 = vcmp.lt.f32.partialorder %v522, 0.0004427343
    %v524 = vsel %vm523, %v521, %v518
    %v525 = vadd.f32 %v511, %v524
    %v526 = vadd.f32 %v525, 0.0
    %527 = vset.pattern.permute.xlu0 2
    %528 = vperm.xlu0 %527, %v59
    %v529 = vpop.permute.xlu0 %528
    %vm530 = vcmp.eq.s32.totalorder %v529, %v61
    %v531 = vsel %vm530, 1, 0
    %v532 = vcvt.s32.f32 %v531
    %v533 = vmul.f32 %v532, %v466
    %v534 = vsel %vm91, %v533, 0.0
    %535 = vadd.xlane.f32.xlu0 %v534
    %v536 = vpop.xlane.xlu0 %535
    %v537 = vmax.f32 %v536, 0.0
    %v538 = vand.u32 2147483647, %v536
    %v539 = vsub.f32 0.0, %v538
    %v540 = vmul.f32 %v539, 1.442695
    %v541 = vpow.pop %v540
    %v542 = vadd.f32 %v541, 1.0
    %v543 = vlog2.pop %v542
    %v544 = vmul.f32 %v543, 0.6931472
    %v545 = vmul.f32 -0.5, %v541
    %v546 = vadd.f32 %v545, 1.0
    %v547 = vmul.f32 %v546, %v541
    %v548 = vand.u32 2147483647, %v541
    %vm549 = vcmp.lt.f32.partialorder %v548, 0.0004427343
    %v550 = vsel %vm549, %v547, %v544
    %v551 = vadd.f32 %v537, %v550
    %v552 = vadd.f32 %v526, %v551
    %553 = vset.pattern.permute.xlu0 3
    %554 = vperm.xlu0 %553, %v59
    %v555 = vpop.permute.xlu0 %554
    %vm556 = vcmp.eq.s32.totalorder %v555, %v61
    %v557 = vsel %vm556, 1, 0
    %v558 = vcvt.s32.f32 %v557
    %v559 = vmul.f32 %v558, %v466
    %v560 = vsel %vm91, %v559, 0.0
    %561 = vadd.xlane.f32.xlu0 %v560
    %v562 = vpop.xlane.xlu0 %561
    %v563 = vmax.f32 %v562, 0.0
    %v564 = vand.u32 2147483647, %v562
    %v565 = vsub.f32 0.0, %v564
    %v566 = vmul.f32 %v565, 1.442695
    %v567 = vpow.pop %v566
    %v568 = vadd.f32 %v567, 1.0
    %v569 = vlog2.pop %v568
    %v570 = vmul.f32 %v569, 0.6931472
    %v571 = vmul.f32 -0.5, %v567
    %v572 = vadd.f32 %v571, 1.0
    %v573 = vmul.f32 %v572, %v567
    %v574 = vand.u32 2147483647, %v567
    %vm575 = vcmp.lt.f32.partialorder %v574, 0.0004427343
    %v576 = vsel %vm575, %v573, %v570
    %v577 = vadd.f32 %v563, %v576
    %v578 = vadd.f32 %v552, %v577
    %579 = vset.pattern.permute.xlu0 4
    %580 = vperm.xlu0 %579, %v59
    %v581 = vpop.permute.xlu0 %580
    %vm582 = vcmp.eq.s32.totalorder %v581, %v61
    %v583 = vsel %vm582, 1, 0
    %v584 = vcvt.s32.f32 %v583
    %v585 = vmul.f32 %v584, %v466
    %v586 = vsel %vm91, %v585, 0.0
    %587 = vadd.xlane.f32.xlu0 %v586
    %v588 = vpop.xlane.xlu0 %587
    %v589 = vmax.f32 %v588, 0.0
    %v590 = vand.u32 2147483647, %v588
    %v591 = vsub.f32 0.0, %v590
    %v592 = vmul.f32 %v591, 1.442695
    %v593 = vpow.pop %v592
    %v594 = vadd.f32 %v593, 1.0
    %v595 = vlog2.pop %v594
    %v596 = vmul.f32 %v595, 0.6931472
    %v597 = vmul.f32 -0.5, %v593
    %v598 = vadd.f32 %v597, 1.0
    %v599 = vmul.f32 %v598, %v593
    %v600 = vand.u32 2147483647, %v593
    %vm601 = vcmp.lt.f32.partialorder %v600, 0.0004427343
    %v602 = vsel %vm601, %v599, %v596
    %v603 = vadd.f32 %v589, %v602
    %v604 = vadd.f32 %v578, %v603
    %605 = vset.pattern.permute.xlu0 5
    %606 = vperm.xlu0 %605, %v59
    %v607 = vpop.permute.xlu0 %606
    %vm608 = vcmp.eq.s32.totalorder %v607, %v61
    %v609 = vsel %vm608, 1, 0
    %v610 = vcvt.s32.f32 %v609
    %v611 = vmul.f32 %v610, %v466
    %v612 = vsel %vm91, %v611, 0.0
    %613 = vadd.xlane.f32.xlu0 %v612
    %v614 = vpop.xlane.xlu0 %613
    %v615 = vmax.f32 %v614, 0.0
    %v616 = vand.u32 2147483647, %v614
    %v617 = vsub.f32 0.0, %v616
    %v618 = vmul.f32 %v617, 1.442695
    %v619 = vpow.pop %v618
    %v620 = vadd.f32 %v619, 1.0
    %v621 = vlog2.pop %v620
    %v622 = vmul.f32 %v621, 0.6931472
    %v623 = vmul.f32 -0.5, %v619
    %v624 = vadd.f32 %v623, 1.0
    %v625 = vmul.f32 %v624, %v619
    %v626 = vand.u32 2147483647, %v619
    %vm627 = vcmp.lt.f32.partialorder %v626, 0.0004427343
    %v628 = vsel %vm627, %v625, %v622
    %v629 = vadd.f32 %v615, %v628
    %v630 = vadd.f32 %v604, %v629
    %v631 = vsel %vm473, %v500, 0.0
    %v632 = vsel %vm473, %v630, 0.0
    %vm633 = vcmask 7168
    %v634 = vsel %vm633, %v631, 0.0
    %635 = vadd.xlane.f32.xlu0 %v634
    %v636 = vpop.xlane.xlu0 %635
    %v637 = vrot.slane %v636, 4
    %v638 = vadd.f32 %v636, %v637
    %v639 = vrot.slane %v638, 2
    %v640 = vadd.f32 %v638, %v639
    %v641 = vrot.slane %v640, 1
    %v642 = vadd.f32 %v640, %v641
    %s643 = vtos %v642
    %s644 = smul.f32 %s643, 0.125
    %v645 = vsel %vm633, %v632, 0.0
    %646 = vadd.xlane.f32.xlu0 %v645
    %v647 = vpop.xlane.xlu0 %646
    %v648 = vrot.slane %v647, 4
    %v649 = vadd.f32 %v647, %v648
    %v650 = vrot.slane %v649, 2
    %v651 = vadd.f32 %v649, %v650
    %v652 = vrot.slane %v651, 1
    %v653 = vadd.f32 %v651, %v652
    %s654 = vtos %v653
    %s655 = smul.f32 %s654, 0.025
    %s656 = sadd.f32 %s644, %s655
    %v657 = vstv %s656
    %v658 = vadd.f32 %v657, 0.0
    %659 = vst [vmem:[#allocation7] sm:$0xff] %v658
    // Predicated region
    $region26: #{tpu_custom_call.1} parent=1 // pred_check
      _
    $region27: #{tpu_custom_call.1} parent=1 // pred_check_branch
      %661 = sbr.rel (0) target = $region29
    $region28: #{tpu_custom_call.1} parent=1 // pred_region
      %663 = vsyncadd [#allocation4], 0
      %s665 = sshll.u32 [#allocation7], 4
      %s666 = int_to_ptr.vmem [resolvable:$true] %s665
      %s667 = sshll.u32 %s4, 4
      %s668 = int_to_ptr.hbm [resolvable:$true] %s667
      %670 = dma.vmem_to_hbm [thread:$0]  %s666, 128, %s668, [#allocation4]
    $region29: #{tpu_custom_call.1} parent=1 // pred_fallthru
      _
    // Predicated region
    $region30: #{tpu_custom_call.1} parent=1 // pred_check
      _
    $region31: #{tpu_custom_call.1} parent=1 // pred_check_branch
      %672 = sbr.rel (0) target = $region33
    $region32: #{tpu_custom_call.1} parent=1 // pred_region
      %674 = dma.done [#allocation4], 128
    $region33: #{tpu_custom_call.1} parent=1 // pred_fallthru
      _
    %675 = vsyncpa [#allocation3], 1
    %676 = vsyncpa [#allocation6], 1
    %677 = vsyncpa [#allocation4], 1

</llo_original>
